<compile_context>
chip_gen: v5e
topology: v5e:2x2
jax: 0.10.0
libtpu: 0.0.40
codegen_flags: <defaults>
</compile_context>

<pallas_src>
import functools

import jax
import jax.numpy as jnp
from jax.experimental import pallas as pl
from jax.experimental.pallas import tpu as pltpu


def _round_up(x, m):
    return (x + m - 1) // m * m


def two_layer_net_kernel(x_ref, w1_ref, b1_ref, w2_ref, b2_ref, o_ref):
    # linear1: bf16 x bf16 -> f32 accumulate on the MXU.
    h = jnp.dot(x_ref[...], w1_ref[...], preferred_element_type=jnp.float32)
    # f32 epilogue: bias add + clamp(min=0) == ReLU.
    h = jnp.maximum(h + b1_ref[...], 0.0)
    # linear2: cast activation back to bf16 for the MXU, f32 accumulate.
    y = jnp.dot(h.astype(w2_ref.dtype), w2_ref[...],
                preferred_element_type=jnp.float32)
    o_ref[...] = (y + b2_ref[...]).astype(o_ref.dtype)


@functools.partial(jax.jit, static_argnames=("tm",))
def two_layer_net(x, w1, b1, w2, b2, *, tm=512):
    """relu(x @ w1 + b1) @ w2 + b2 with lane-padded, N-tiled Pallas kernel."""
    N, D_in = x.shape
    H = w1.shape[1]
    D_out = w2.shape[1]
    out_dtype = x.dtype

    # Lane-dense padded dims (multiples of 128) and N tiling.
    Dp = _round_up(D_in, 128)
    Hp = _round_up(H, 128)
    Op = _round_up(D_out, 128)
    tm = min(tm, _round_up(N, 8))
    Np = _round_up(N, tm)

    # Zero padding is exact: padded input cols hit zero weight rows, padded
    # hidden units are relu(0 + 0) = 0 and hit zero rows of w2, padded output
    # cols are sliced away below.
    xp = jnp.pad(x, ((0, Np - N), (0, Dp - D_in))).astype(jnp.bfloat16)
    w1p = jnp.pad(w1, ((0, Dp - D_in), (0, Hp - H))).astype(jnp.bfloat16)
    b1p = jnp.pad(b1, ((0, 0), (0, Hp - H))).astype(jnp.float32)
    w2p = jnp.pad(w2, ((0, Hp - H), (0, Op - D_out))).astype(jnp.bfloat16)
    b2p = jnp.pad(b2, ((0, 0), (0, Op - D_out))).astype(jnp.float32)

    grid = (Np // tm,)

    # Advisory cost estimate so XLA schedules producers/consumers around us.
    flops = 2 * Np * (Dp * Hp + Hp * Op)
    bytes_accessed = (xp.size * 2 + w1p.size * 2 + w2p.size * 2
                      + b1p.size * 4 + b2p.size * 4 + Np * Op * 4)

    # Per-tile VMEM budget (double-buffered x/out tiles, double-buffered
    # weights/biases, f32 intermediate), sized with ~2x headroom and capped
    # below v7x's 64 MiB physical VMEM.
    tile_bytes = (2 * tm * Dp * 2 + 2 * tm * Op * 4
                  + 2 * (Dp * Hp + Hp * Op) * 2 + 2 * (Hp + Op) * 4
                  + tm * Hp * 4)
    vmem_limit = int(min(48 * 1024 * 1024, max(8 * 1024 * 1024, 2 * tile_bytes)))

    out_padded = pl.pallas_call(
        two_layer_net_kernel,
        out_shape=jax.ShapeDtypeStruct((Np, Op), out_dtype),
        grid_spec=pltpu.PrefetchScalarGridSpec(
            num_scalar_prefetch=0,
            grid=grid,
            in_specs=[
                pl.BlockSpec((tm, Dp), lambda i: (i, 0)),   # x: tiled over N
                pl.BlockSpec((Dp, Hp), lambda i: (0, 0)),   # w1: resident
                pl.BlockSpec((1, Hp), lambda i: (0, 0)),    # b1: resident
                pl.BlockSpec((Hp, Op), lambda i: (0, 0)),   # w2: resident
                pl.BlockSpec((1, Op), lambda i: (0, 0)),    # b2: resident
            ],
            out_specs=pl.BlockSpec((tm, Op), lambda i: (i, 0)),
        ),
        compiler_params=pltpu.CompilerParams(
            dimension_semantics=("parallel",),  # megacore sharding on v7x
            vmem_limit_bytes=vmem_limit,
        ),
        cost_estimate=pl.CostEstimate(
            flops=flops, transcendentals=0, bytes_accessed=bytes_accessed),
    )(xp, w1p, b1p, w2p, b2p)

    return out_padded[:N, :D_out]


def init_linear_params(key, fan_in, fan_out):
    # Mimic torch.nn.Linear default init: U(-1/sqrt(fan_in), 1/sqrt(fan_in)).
    kw, kb = jax.random.split(key)
    bound = 1.0 / jnp.sqrt(jnp.float32(fan_in))
    # Stored as (in, out), i.e. transpose of PyTorch's (out, in) weight.
    w = jax.random.uniform(kw, (fan_in, fan_out), jnp.float32, -bound, bound)
    b = jax.random.uniform(kb, (1, fan_out), jnp.float32, -bound, bound)
    return w, b


if __name__ == "__main__":
    # Small shapes consistent with the module: x = randn(N, D_in).
    # TODO(synk): at these toy sizes the call is launch/DMA-latency bound;
    # batch many MLP instances along N (or use plain XLA) for real workloads.
    N, D_in, H, D_out = 8, 32, 64, 16

    key = jax.random.PRNGKey(0)
    kx, k1, k2 = jax.random.split(key, 3)

    x = jax.random.normal(kx, (N, D_in), jnp.float32)
    w1, b1 = init_linear_params(k1, D_in, H)
    w2, b2 = init_linear_params(k2, H, D_out)

    y = two_layer_net(x, w1, b1, w2, b2)
    jax.block_until_ready(y)

    # Pure-JAX f32 reference; tolerance loosened for bf16 MXU inputs.
    h_ref = jnp.maximum(x @ w1 + b1, 0.0)
    y_ref = h_ref @ w2 + b2
    assert y.shape == (N, D_out)
    assert jnp.allclose(y, y_ref, atol=2e-2, rtol=2e-2), (
        float(jnp.max(jnp.abs(y - y_ref))))

    print("KERNEL_OK")
</pallas_src>

<mosaic_0001>
module attributes {stable_mosaic.version = 11 : i64} {
  func.func @two_layer_net_kernel(%arg0: i32, %arg1: memref<8x128xbf16, #tpu.memory_space<vmem>>, %arg2: memref<128x128xbf16, #tpu.memory_space<vmem>>, %arg3: memref<1x128xf32, #tpu.memory_space<vmem>>, %arg4: memref<128x128xbf16, #tpu.memory_space<vmem>>, %arg5: memref<1x128xf32, #tpu.memory_space<vmem>>, %arg6: memref<8x128xf32, #tpu.memory_space<vmem>>) attributes {dimension_semantics = [#tpu.dimension_semantics<parallel>], iteration_bounds = array<i64: 1>, scalar_prefetch = 0 : i64, scratch_operands = 0 : i64, tpu.core_type = #tpu.core_type<tc>, window_params = [{transform_indices = @transform_0, window_bounds = array<i64: 8, 128>}, {pipeline_mode = #tpu.pipeline_mode<synchronous>, transform_indices = @transform_1, window_bounds = array<i64: 128, 128>}, {pipeline_mode = #tpu.pipeline_mode<synchronous>, transform_indices = @transform_2, window_bounds = array<i64: 1, 128>}, {pipeline_mode = #tpu.pipeline_mode<synchronous>, transform_indices = @transform_3, window_bounds = array<i64: 128, 128>}, {pipeline_mode = #tpu.pipeline_mode<synchronous>, transform_indices = @transform_4, window_bounds = array<i64: 1, 128>}, {transform_indices = @transform_5, window_bounds = array<i64: 8, 128>}]} {
    %c0 = arith.constant 0 : index
    %c0_0 = arith.constant 0 : index
    %0 = vector.load %arg1[%c0, %c0_0] : memref<8x128xbf16, #tpu.memory_space<vmem>>, vector<8x128xbf16>
    %c0_1 = arith.constant 0 : index
    %c0_2 = arith.constant 0 : index
    %1 = vector.load %arg2[%c0_1, %c0_2] : memref<128x128xbf16, #tpu.memory_space<vmem>>, vector<128x128xbf16>
    %cst = arith.constant dense<0.000000e+00> : vector<8x128xf32>
    %2 = tpu.matmul %0, %1, %cst {dimension_numbers = #tpu.dot_dimension_numbers<[1], [0], [0], [1], [0, 0, 1, 1], [], []>} : vector<8x128xbf16>, vector<128x128xbf16>, vector<8x128xf32> -> vector<8x128xf32>
    %c0_3 = arith.constant 0 : index
    %c0_4 = arith.constant 0 : index
    %3 = vector.load %arg3[%c0_3, %c0_4] : memref<1x128xf32, #tpu.memory_space<vmem>>, vector<1x128xf32>
    %4 = vector.broadcast %3 : vector<1x128xf32> to vector<8x128xf32>
    %5 = arith.addf %2, %4 : vector<8x128xf32>
    %cst_5 = arith.constant 0.000000e+00 : f32
    %6 = vector.broadcast %cst_5 : f32 to vector<8x128xf32>
    %7 = arith.maximumf %5, %6 : vector<8x128xf32>
    %8 = arith.truncf %7 : vector<8x128xf32> to vector<8x128xbf16>
    %c0_6 = arith.constant 0 : index
    %c0_7 = arith.constant 0 : index
    %9 = vector.load %arg4[%c0_6, %c0_7] : memref<128x128xbf16, #tpu.memory_space<vmem>>, vector<128x128xbf16>
    %cst_8 = arith.constant dense<0.000000e+00> : vector<8x128xf32>
    %10 = tpu.matmul %8, %9, %cst_8 {dimension_numbers = #tpu.dot_dimension_numbers<[1], [0], [0], [1], [0, 0, 1, 1], [], []>} : vector<8x128xbf16>, vector<128x128xbf16>, vector<8x128xf32> -> vector<8x128xf32>
    %c0_9 = arith.constant 0 : index
    %c0_10 = arith.constant 0 : index
    %11 = vector.load %arg5[%c0_9, %c0_10] : memref<1x128xf32, #tpu.memory_space<vmem>>, vector<1x128xf32>
    %12 = vector.broadcast %11 : vector<1x128xf32> to vector<8x128xf32>
    %13 = arith.addf %10, %12 : vector<8x128xf32>
    %c0_11 = arith.constant 0 : index
    %c0_12 = arith.constant 0 : index
    %14 = vector.load %arg6[%c0_11, %c0_12] : memref<8x128xf32, #tpu.memory_space<vmem>>, vector<8x128xf32>
    tpu.vector_store %arg6[%c0_11, %c0_12], %13 {strides = array<i32>} : memref<8x128xf32, #tpu.memory_space<vmem>>, vector<8x128xf32>,
    return
  }
  func.func @transform_0(%arg0: i32) -> (i32, i32) {
    %c0_i32 = arith.constant 0 : i32
    %c0_i32_0 = arith.constant 0 : i32
    return %arg0, %c0_i32 : i32, i32
  }
  func.func @transform_1(%arg0: i32) -> (i32, i32) {
    %c0_i32 = arith.constant 0 : i32
    %c0_i32_0 = arith.constant 0 : i32
    %c0_i32_1 = arith.constant 0 : i32
    return %c0_i32, %c0_i32_0 : i32, i32
  }
  func.func @transform_2(%arg0: i32) -> (i32, i32) {
    %c0_i32 = arith.constant 0 : i32
    %c0_i32_0 = arith.constant 0 : i32
    %c0_i32_1 = arith.constant 0 : i32
    return %c0_i32, %c0_i32_0 : i32, i32
  }
  func.func @transform_3(%arg0: i32) -> (i32, i32) {
    %c0_i32 = arith.constant 0 : i32
    %c0_i32_0 = arith.constant 0 : i32
    %c0_i32_1 = arith.constant 0 : i32
    return %c0_i32, %c0_i32_0 : i32, i32
  }
  func.func @transform_4(%arg0: i32) -> (i32, i32) {
    %c0_i32 = arith.constant 0 : i32
    %c0_i32_0 = arith.constant 0 : i32
    %c0_i32_1 = arith.constant 0 : i32
    return %c0_i32, %c0_i32_0 : i32, i32
  }
  func.func @transform_5(%arg0: i32) -> (i32, i32) {
    %c0_i32 = arith.constant 0 : i32
    %c0_i32_0 = arith.constant 0 : i32
    return %arg0, %c0_i32 : i32, i32
  }
}

</mosaic_0001>

<llo_original>
// kernel: two_layer_net.1
$region0: #{two_layer_net.1}
  #allocation0 [shape = 'u32[]', space=smem, size = 0x4, offset = 0x4, fixed_abs, tag = 'smem constant byte address 0x4 - core index']
  #allocation1 [shape = 'u32[72,128]{1,0:T(1,128)}', space=vmem, size = 0x9000, scoped, tag = 'internal scratch']
  %s0 = inlined_call_operand.vmem [shape: bf16[8,128], index: 0, kind: input, shape index: {}]
  %s1 = inlined_call_operand.vmem [shape: bf16[128,128], index: 1, kind: input, shape index: {}]
  %s2 = inlined_call_operand.vmem [shape: f32[1,128], index: 2, kind: input, shape index: {}]
  %s3 = inlined_call_operand.vmem [shape: bf16[128,128], index: 3, kind: input, shape index: {}]
  %s4 = inlined_call_operand.vmem [shape: f32[1,128], index: 4, kind: input, shape index: {}]
  %s5 = inlined_call_operand.hbm [shape: f32[8,128], index: 5, kind: output, shape index: {}]
  %s6 = sld [smem:[#allocation0]]
  $region30: #{two_layer_net.1} parent=0
    _
  %s8 = ssub.s32 1, %s6
  %s9 = scalar_select 0, %s8, %s6
  $region1: #{two_layer_net.1} parent=0
    #allocation2 [shape = 'u8[4096]{0}', space=vmem, size = 0x1000, scoped, tag = 'output window, operand 0, single buffered']
    #allocation3 [shape = 's32[1]{0}', space=sflag, size = 0x4, scoped, tag = 'scoped memory for two_layer_net.1']
    %10 = vsyncpa [#allocation3], 0
    // Predicated region
    $region2: #{two_layer_net.1} parent=1 // pred_check
      _
    $region3: #{two_layer_net.1} parent=1 // pred_check_branch
      %12 = sbr.rel (0) target = $region5
    $region4: #{two_layer_net.1} parent=1 // pred_region
      _
    $region5: #{two_layer_net.1} parent=1 // pred_fallthru
      _
    // Predicated region
    $region6: #{two_layer_net.1} parent=1 // pred_check
      _
    $region7: #{two_layer_net.1} parent=1 // pred_check_branch
      %14 = sbr.rel (0) target = $region9
    $region8: #{two_layer_net.1} parent=1 // pred_region
      _
    $region9: #{two_layer_net.1} parent=1 // pred_fallthru
      _
    // Predicated region
    $region10: #{two_layer_net.1} parent=1 // pred_check
      _
    $region11: #{two_layer_net.1} parent=1 // pred_check_branch
      %16 = sbr.rel (0) target = $region13
    $region12: #{two_layer_net.1} parent=1 // pred_region
      _
    $region13: #{two_layer_net.1} parent=1 // pred_fallthru
      _
    // Predicated region
    $region14: #{two_layer_net.1} parent=1 // pred_check
      _
    $region15: #{two_layer_net.1} parent=1 // pred_check_branch
      %18 = sbr.rel (0) target = $region17
    $region16: #{two_layer_net.1} parent=1 // pred_region
      _
    $region17: #{two_layer_net.1} parent=1 // pred_fallthru
      _
    // Predicated region
    $region18: #{two_layer_net.1} parent=1 // pred_check
      _
    $region19: #{two_layer_net.1} parent=1 // pred_check_branch
      %20 = sbr.rel (0) target = $region21
    $region20: #{two_layer_net.1} parent=1 // pred_region
      _
    $region21: #{two_layer_net.1} parent=1 // pred_fallthru
      _
    %v21 = vld [vmem:[%s0] sm:$0xf]
    %v22 = vld [vmem:[%s1] sm:$0xf]
    %v23 = vld [vmem:[%s1 + $0x4] sm:$0xf]
    %v24 = vld [vmem:[%s1 + $0x8] sm:$0xf]
    %v25 = vld [vmem:[%s1 + $0xc] sm:$0xf]
    %v26 = vld [vmem:[%s1 + $0x10] sm:$0xf]
    %v27 = vld [vmem:[%s1 + $0x14] sm:$0xf]
    %v28 = vld [vmem:[%s1 + $0x18] sm:$0xf]
    %v29 = vld [vmem:[%s1 + $0x1c] sm:$0xf]
    %v30 = vld [vmem:[%s1 + $0x20] sm:$0xf]
    %v31 = vld [vmem:[%s1 + $0x24] sm:$0xf]
    %v32 = vld [vmem:[%s1 + $0x28] sm:$0xf]
    %v33 = vld [vmem:[%s1 + $0x2c] sm:$0xf]
    %v34 = vld [vmem:[%s1 + $0x30] sm:$0xf]
    %v35 = vld [vmem:[%s1 + $0x34] sm:$0xf]
    %v36 = vld [vmem:[%s1 + $0x38] sm:$0xf]
    %v37 = vld [vmem:[%s1 + $0x3c] sm:$0xf]
    %v38 = vld [vmem:[%s2] sm:$0x1]
    %v40 = vperm.slane %v38, 0
    %v58 = vunpack.c.l.b16 %v22
    %v59 = vunpack.c.l.b16 %v23
    %v60 = vunpack.c.l.b16 %v24
    %v61 = vunpack.c.l.b16 %v25
    %v62 = vunpack.c.l.b16 %v26
    %v63 = vunpack.c.l.b16 %v27
    %v64 = vunpack.c.l.b16 %v28
    %v65 = vunpack.c.l.b16 %v29
    %v66 = vunpack.c.l.b16 %v30
    %v67 = vunpack.c.l.b16 %v31
    %v68 = vunpack.c.l.b16 %v32
    %v69 = vunpack.c.l.b16 %v33
    %v70 = vunpack.c.l.b16 %v34
    %v71 = vunpack.c.l.b16 %v35
    %v72 = vunpack.c.l.b16 %v36
    %v73 = vunpack.c.l.b16 %v37
    %v74 = vpack.c.b16 %v59, %v58
    %v75 = vpack.c.b16 %v61, %v60
    %v76 = vpack.c.b16 %v63, %v62
    %v77 = vpack.c.b16 %v65, %v64
    %v78 = vpack.c.b16 %v67, %v66
    %v79 = vpack.c.b16 %v69, %v68
    %v80 = vpack.c.b16 %v71, %v70
    %v81 = vpack.c.b16 %v73, %v72
    %90 = vmatpush.bf16.msra.mxu0 %v81
    %91 = vmatpush.bf16.msra.mxu0 %v80
    %92 = vmatpush.bf16.msra.mxu0 %v79
    %93 = vmatpush.bf16.msra.mxu0 %v78
    %94 = vmatpush.bf16.msra.mxu0 %v77
    %95 = vmatpush.bf16.msra.mxu0 %v76
    %96 = vmatpush.bf16.msra.mxu0 %v75
    %97 = vmatpush.bf16.msra.mxu0 %v74
    %98 = vmatmul.bf16.gmra.mxu0 %v21
    %v99 = vpop.f32.mrf.mxu0
    %v100 = vadd.f32 %v40, %v99
    %v101 = vpop.f32.mrf.mxu0
    %102 = vdwg.mxu0
    %v103 = vmax.f32 %v100, 0.0
    %v104 = vpack.c.bf16 %v103, %v103
    %v105 = vld [vmem:[%s3] sm:$0xf]
    %v106 = vld [vmem:[%s3 + $0x4] sm:$0xf]
    %v107 = vld [vmem:[%s3 + $0x8] sm:$0xf]
    %v108 = vld [vmem:[%s3 + $0xc] sm:$0xf]
    %v109 = vld [vmem:[%s3 + $0x10] sm:$0xf]
    %v110 = vld [vmem:[%s3 + $0x14] sm:$0xf]
    %v111 = vld [vmem:[%s3 + $0x18] sm:$0xf]
    %v112 = vld [vmem:[%s3 + $0x1c] sm:$0xf]
    %v113 = vld [vmem:[%s3 + $0x20] sm:$0xf]
    %v114 = vld [vmem:[%s3 + $0x24] sm:$0xf]
    %v115 = vld [vmem:[%s3 + $0x28] sm:$0xf]
    %v116 = vld [vmem:[%s3 + $0x2c] sm:$0xf]
    %v117 = vld [vmem:[%s3 + $0x30] sm:$0xf]
    %v118 = vld [vmem:[%s3 + $0x34] sm:$0xf]
    %v119 = vld [vmem:[%s3 + $0x38] sm:$0xf]
    %v120 = vld [vmem:[%s3 + $0x3c] sm:$0xf]
    %v121 = vld [vmem:[%s4] sm:$0x1]
    %v123 = vperm.slane %v121, 0
    %v141 = vunpack.c.l.b16 %v105
    %v142 = vunpack.c.l.b16 %v106
    %v143 = vunpack.c.l.b16 %v107
    %v144 = vunpack.c.l.b16 %v108
    %v145 = vunpack.c.l.b16 %v109
    %v146 = vunpack.c.l.b16 %v110
    %v147 = vunpack.c.l.b16 %v111
    %v148 = vunpack.c.l.b16 %v112
    %v149 = vunpack.c.l.b16 %v113
    %v150 = vunpack.c.l.b16 %v114
    %v151 = vunpack.c.l.b16 %v115
    %v152 = vunpack.c.l.b16 %v116
    %v153 = vunpack.c.l.b16 %v117
    %v154 = vunpack.c.l.b16 %v118
    %v155 = vunpack.c.l.b16 %v119
    %v156 = vunpack.c.l.b16 %v120
    %v157 = vpack.c.b16 %v142, %v141
    %v158 = vpack.c.b16 %v144, %v143
    %v159 = vpack.c.b16 %v146, %v145
    %v160 = vpack.c.b16 %v148, %v147
    %v161 = vpack.c.b16 %v150, %v149
    %v162 = vpack.c.b16 %v152, %v151
    %v163 = vpack.c.b16 %v154, %v153
    %v164 = vpack.c.b16 %v156, %v155
    %173 = vmatpush.bf16.msra.mxu0 %v164
    %174 = vmatpush.bf16.msra.mxu0 %v163
    %175 = vmatpush.bf16.msra.mxu0 %v162
    %176 = vmatpush.bf16.msra.mxu0 %v161
    %177 = vmatpush.bf16.msra.mxu0 %v160
    %178 = vmatpush.bf16.msra.mxu0 %v159
    %179 = vmatpush.bf16.msra.mxu0 %v158
    %180 = vmatpush.bf16.msra.mxu0 %v157
    %181 = vmatmul.bf16.gmra.mxu0 %v104
    %v182 = vpop.f32.mrf.mxu0
    %v183 = vadd.f32 %v123, %v182
    %v184 = vpop.f32.mrf.mxu0
    %185 = vdwg.mxu0
    %186 = vst [vmem:[#allocation2] sm:$0xff] %v183
    // Predicated region
    $region22: #{two_layer_net.1} parent=1 // pred_check
      _
    $region23: #{two_layer_net.1} parent=1 // pred_check_branch
      %188 = sbr.rel (0) target = $region25
    $region24: #{two_layer_net.1} parent=1 // pred_region
      %190 = vsyncadd [#allocation3], 0
      %s192 = sshll.u32 [#allocation2], 4
      %s193 = int_to_ptr.vmem [resolvable:$true] %s192
      %s194 = sshll.u32 %s5, 4
      %s195 = int_to_ptr.hbm [resolvable:$true] %s194
      %197 = dma.vmem_to_hbm [thread:$0]  %s193, 128, %s195, [#allocation3]
    $region25: #{two_layer_net.1} parent=1 // pred_fallthru
      _
    // Predicated region
    $region26: #{two_layer_net.1} parent=1 // pred_check
      _
    $region27: #{two_layer_net.1} parent=1 // pred_check_branch
      %199 = sbr.rel (0) target = $region29
    $region28: #{two_layer_net.1} parent=1 // pred_region
      %201 = dma.done [#allocation3], 128
    $region29: #{two_layer_net.1} parent=1 // pred_fallthru
      _
    %202 = vsyncpa [#allocation3], 1

</llo_original>
